<compile_context>
chip_gen: v7x
topology: tpu7x:2x2x1
jax: 0.10.0
libtpu: 0.0.40
codegen_flags: <defaults>
</compile_context>

<pallas_src>
import jax
import jax.numpy as jnp
from jax.experimental import pallas as pl
from jax.experimental.pallas import tpu as pltpu


def gcn_ff_kernel(a_ref, wbd_ref, x_ref, o_ref):
    # a_ref:   (N, N)              sym-normalized adjacency (VMEM-resident)
    # wbd_ref: (T*F_in, T*F_out)   block-diagonal Theta = kron(I_T, W) (resident)
    # x_ref:   (1, N, T*F_in)      one batch element, all timesteps fused into lanes
    # o_ref:   (1, N, T*F_out)
    x = x_ref[0]                                                        # (N, T*F_in)
    # Node aggregation for all timesteps at once (lane dim T*F_in >= 128).
    ax = jnp.dot(a_ref[...], x, preferred_element_type=jnp.float32)    # (N, T*F_in)
    # Per-timestep Theta projection in the fused-lane layout (no relayout).
    h = jnp.dot(ax, wbd_ref[...], preferred_element_type=jnp.float32)  # (N, T*F_out)
    # Single relu (relu∘relu == relu); dropout p=0 is identity.
    o_ref[0] = jnp.maximum(h, 0.0).astype(o_ref.dtype)


def position_wise_gcn_feedforward(x, adj_sym_norm, theta_w):
    """
    x:            (B, N, T, F_in)
    adj_sym_norm: (N, N)
    theta_w:      (F_in, F_out)   (PyTorch Linear weight transposed)
    returns:      (B, N, T, F_out)
    """
    B, N, T, F_in = x.shape
    F_out = theta_w.shape[1]

    # Block-diagonal Theta so the projection runs in the (N, T*F) lane layout.
    # Built once per call (tiny, outside the kernel); W on the diagonal blocks.
    w_blockdiag = jnp.kron(jnp.eye(T, dtype=theta_w.dtype), theta_w)   # (T*F_in, T*F_out)

    # Metadata-only reshape (contiguous trailing dims) — no HBM transpose pass.
    x_flat = x.reshape(B, N, T * F_in)

    out_flat = pl.pallas_call(
        gcn_ff_kernel,
        out_shape=jax.ShapeDtypeStruct((B, N, T * F_out), x.dtype),
        grid_spec=pltpu.PrefetchScalarGridSpec(
            num_scalar_prefetch=0,
            grid=(B,),
            in_specs=[
                pl.BlockSpec((N, N), lambda b: (0, 0)),
                pl.BlockSpec((T * F_in, T * F_out), lambda b: (0, 0)),
                pl.BlockSpec((1, N, T * F_in), lambda b: (b, 0, 0)),
            ],
            out_specs=pl.BlockSpec((1, N, T * F_out), lambda b: (b, 0, 0)),
        ),
        compiler_params=pltpu.CompilerParams(
            dimension_semantics=("parallel",)),
    )(adj_sym_norm, w_blockdiag, x_flat)

    # Free reshape back to the module's output layout.
    return out_flat.reshape(B, N, T, F_out)


def make_sym_norm_adj(key, n):
    """Deterministic D^{-1/2} (A + I) D^{-1/2} adjacency."""
    a = (jax.random.uniform(key, (n, n)) > 0.7).astype(jnp.float32)
    a = jnp.maximum(a, a.T)                         # symmetrize
    a = a + jnp.eye(n, dtype=jnp.float32)           # self loops
    d = jnp.sum(a, axis=1)
    d_inv_sqrt = 1.0 / jnp.sqrt(d)
    return a * d_inv_sqrt[:, None] * d_inv_sqrt[None, :]


if __name__ == "__main__":
    B, N, T, D = 2, 16, 8, 32   # batch, nodes, timesteps, d_model (F_in == F_out)

    key = jax.random.PRNGKey(0)
    k_x, k_adj, k_w = jax.random.split(key, 3)

    x = jax.random.normal(k_x, (B, N, T, D), dtype=jnp.float32)
    adj = make_sym_norm_adj(k_adj, N)
    # Theta: nn.Linear(D, D, bias=False); stored as (F_in, F_out)
    theta_w = (jax.random.normal(k_w, (D, D), dtype=jnp.float32)
               * (1.0 / jnp.sqrt(jnp.float32(D))))

    out = position_wise_gcn_feedforward(x, adj, theta_w)
    jax.block_until_ready(out)

    # Pure-JAX reference on the original layout.
    ref = jnp.einsum("nm,bmtf->bntf", adj, x)
    ref = jnp.maximum(jnp.einsum("bntf,fo->bnto", ref, theta_w), 0.0)
    assert out.shape == (B, N, T, D)
    assert jnp.allclose(out, ref, atol=1e-4, rtol=1e-4)

    print("KERNEL_OK")
</pallas_src>

<mosaic_0001>
module attributes {stable_mosaic.version = 11 : i64} {
  func.func @gcn_ff_kernel(%arg0: i32, %arg1: memref<16x16xf32, #tpu.memory_space<vmem>>, %arg2: memref<256x256xf32, #tpu.memory_space<vmem>>, %arg3: memref<1x16x256xf32, #tpu.memory_space<vmem>>, %arg4: memref<1x16x256xf32, #tpu.memory_space<vmem>>) attributes {dimension_semantics = [#tpu.dimension_semantics<parallel>], iteration_bounds = array<i64: 2>, scalar_prefetch = 0 : i64, scratch_operands = 0 : i64, tpu.core_type = #tpu.core_type<tc>, window_params = [{pipeline_mode = #tpu.pipeline_mode<synchronous>, transform_indices = @transform_0, window_bounds = array<i64: 16, 16>}, {pipeline_mode = #tpu.pipeline_mode<synchronous>, transform_indices = @transform_1, window_bounds = array<i64: 256, 256>}, {transform_indices = @transform_2, window_bounds = array<i64: 1, 16, 256>}, {transform_indices = @transform_3, window_bounds = array<i64: 1, 16, 256>}]} {
    %c0 = arith.constant 0 : index
    %c0_0 = arith.constant 0 : index
    %c0_1 = arith.constant 0 : index
    %0 = vector.load %arg3[%c0, %c0_0, %c0_1] : memref<1x16x256xf32, #tpu.memory_space<vmem>>, vector<1x16x256xf32>
    %1 = vector.shape_cast %0 : vector<1x16x256xf32> to vector<16x256xf32>
    %c0_2 = arith.constant 0 : index
    %c0_3 = arith.constant 0 : index
    %2 = vector.load %arg1[%c0_2, %c0_3] : memref<16x16xf32, #tpu.memory_space<vmem>>, vector<16x16xf32>
    %cst = arith.constant dense<0.000000e+00> : vector<16x256xf32>
    %3 = tpu.matmul %2, %1, %cst {dimension_numbers = #tpu.dot_dimension_numbers<[1], [0], [0], [1], [0, 0, 1, 1], [], []>} : vector<16x16xf32>, vector<16x256xf32>, vector<16x256xf32> -> vector<16x256xf32>
    %c0_4 = arith.constant 0 : index
    %c0_5 = arith.constant 0 : index
    %4 = vector.load %arg2[%c0_4, %c0_5] : memref<256x256xf32, #tpu.memory_space<vmem>>, vector<256x256xf32>
    %cst_6 = arith.constant dense<0.000000e+00> : vector<16x256xf32>
    %5 = tpu.matmul %3, %4, %cst_6 {dimension_numbers = #tpu.dot_dimension_numbers<[1], [0], [0], [1], [0, 0, 1, 1], [], []>} : vector<16x256xf32>, vector<256x256xf32>, vector<16x256xf32> -> vector<16x256xf32>
    %cst_7 = arith.constant 0.000000e+00 : f32
    %6 = vector.broadcast %cst_7 : f32 to vector<16x256xf32>
    %7 = arith.maximumf %5, %6 : vector<16x256xf32>
    %c0_8 = arith.constant 0 : index
    %c0_9 = arith.constant 0 : index
    %c0_10 = arith.constant 0 : index
    %8 = vector.load %arg4[%c0_8, %c0_9, %c0_10] : memref<1x16x256xf32, #tpu.memory_space<vmem>>, vector<1x16x256xf32>
    %9 = vector.shape_cast %8 : vector<1x16x256xf32> to vector<16x256xf32>
    %10 = vector.shape_cast %7 : vector<16x256xf32> to vector<1x16x256xf32>
    tpu.vector_store %arg4[%c0_8, %c0_9, %c0_10], %10 {strides = array<i32>} : memref<1x16x256xf32, #tpu.memory_space<vmem>>, vector<1x16x256xf32>,
    return
  }
  func.func @transform_0(%arg0: i32) -> (i32, i32) {
    %c0_i32 = arith.constant 0 : i32
    %c0_i32_0 = arith.constant 0 : i32
    %c0_i32_1 = arith.constant 0 : i32
    return %c0_i32, %c0_i32_0 : i32, i32
  }
  func.func @transform_1(%arg0: i32) -> (i32, i32) {
    %c0_i32 = arith.constant 0 : i32
    %c0_i32_0 = arith.constant 0 : i32
    %c0_i32_1 = arith.constant 0 : i32
    return %c0_i32, %c0_i32_0 : i32, i32
  }
  func.func @transform_2(%arg0: i32) -> (i32, i32, i32) {
    %c0_i32 = arith.constant 0 : i32
    %c0_i32_0 = arith.constant 0 : i32
    %c0_i32_1 = arith.constant 0 : i32
    return %arg0, %c0_i32, %c0_i32_0 : i32, i32, i32
  }
  func.func @transform_3(%arg0: i32) -> (i32, i32, i32) {
    %c0_i32 = arith.constant 0 : i32
    %c0_i32_0 = arith.constant 0 : i32
    %c0_i32_1 = arith.constant 0 : i32
    return %arg0, %c0_i32, %c0_i32_0 : i32, i32, i32
  }
}

</mosaic_0001>

<llo_original>
// kernel: tpu_custom_call.1
$region0: #{tpu_custom_call.1}
  #allocation0 [shape = 'u32[]', space=smem, size = 0x4, offset = 0x4, fixed_abs, tag = 'smem constant byte address 0x4 - core index']
  #allocation1 [shape = 'u32[144,128]{1,0:T(1,128)}', space=vmem, size = 0x12000, scoped, tag = 'internal scratch']
  %s0 = inlined_call_operand.hbm [shape: f32[16,16], index: 0, kind: input, shape index: {}]
  %s1 = inlined_call_operand.hbm [shape: f32[256,256], index: 1, kind: input, shape index: {}]
  %s2 = inlined_call_operand.hbm [shape: f32[2,16,256], index: 2, kind: input, shape index: {}]
  %s3 = inlined_call_operand.hbm [shape: f32[2,16,256], index: 3, kind: output, shape index: {}]
  %s4 = sld [smem:[#allocation0]]
  $region57: #{tpu_custom_call.1} parent=0
    _
  %s6 = ssub.s32 1, %s4
  %s7 = scalar_select 0, %s6, %s4
  $region1: #{tpu_custom_call.1} parent=0
    #allocation2 [shape = 'u8[8192]{0}', space=vmem, size = 0x2000, scoped, tag = 'input window, operand 0, single buffered']
    #allocation3 [shape = 's32[2]{0}', space=sflag, size = 0x8, scoped, tag = 'scoped memory for tpu_custom_call.1']
    #allocation4 [shape = 's32[2]{0}', space=sflag, size = 0x8, scoped, tag = 'scoped memory for tpu_custom_call.1']
    #allocation5 [shape = 'u8[262144]{0}', space=vmem, size = 0x40000, scoped, tag = 'input window, operand 1, single buffered']
    #allocation6 [shape = 's32[1]{0}', space=sflag, size = 0x4, scoped, tag = 'scoped memory for tpu_custom_call.1']
    #allocation7 [shape = 'u8[32768]{0}', space=vmem, size = 0x8000, scoped, tag = 'input window, operand 2']
    #allocation8 [shape = 'u8[32768]{0}', space=vmem, size = 0x8000, scoped, tag = 'output window, operand 0']
    %8 = vsyncpa [#allocation3], 0
    %9 = vsyncpa [#allocation6], 0
    %10 = vsyncpa [#allocation4], 0
    %s11 = scalar_lea.sflag [#allocation4], 1
    %12 = vsyncpa %s11, 0
    loop: start=0, step=1, limit=4
    $region2: #{tpu_custom_call.1} parent=1 // loop_pre_header
      _
    $region3: #{tpu_custom_call.1} parent=1 // loop_header
      %s14 = sphi 0, %s18
      %p15 = scmp.ge.s32.totalorder %s14, 4
      %s22 = sphi 0, %s22
      %s24 = sphi 0, %s22
      %s25 = sphi 0, %s24
      %s39 = sphi 0, %s25
      %s43 = sphi 0, %s43
      %s45 = sphi 0, %s43
      %s46 = sphi 0, %s45
      %s60 = sphi 0, %s46
      %s66 = sphi 0, %s68
      %s69 = sphi 0, %s66
      %s70 = sphi 0, %s69
      %s86 = sphi 0, %s70
      %s92 = sphi 0, %s94
      %s95 = sphi 0, %s92
      %s96 = sphi 0, %s95
      %s112 = sphi 0, %s96
    $region4: #{tpu_custom_call.1} parent=1 // loop_header_branch
      %17 = sbr.rel (%p15) target = $region8
    $region5: #{tpu_custom_call.1} parent=1 // loop_body
      %s19 = ssub.s32 %s14, 1
      %s20 = ssub.s32 %s14, 2
      %s21 = sadd.s32 %s14, 1
      %s23 = sadd.s32 %s22, 1
      %p26 = scmp.eq.s32.totalorder %s14, 1
      %p27 = scmp.ne.s32.totalorder %s22, %s24
      %p28 = scmp.eq.s32.totalorder %s14, 0
      %p29 = por %p27, %p28
      %p30 = scmp.ne.s32.totalorder %s22, %s24
      %p31 = scmp.eq.s32.totalorder %s19, 1
      %p32 = por %p30, %p31
      %p33 = scmp.ne.s32.totalorder %s24, %s25
      %p34 = scmp.eq.s32.totalorder %s19, 0
      %p35 = por %p33, %p34
      %p36 = scmp.ne.s32.totalorder %s24, %s25
      %p37 = scmp.eq.s32.totalorder %s20, 1
      %p38 = por %p36, %p37
      %p40 = scmp.ne.s32.totalorder %s25, %s39
      %p41 = scmp.eq.s32.totalorder %s20, 0
      %p42 = por %p40, %p41
      %s44 = sadd.s32 %s43, 1
      %p47 = scmp.eq.s32.totalorder %s14, 1
      %p48 = scmp.ne.s32.totalorder %s43, %s45
      %p49 = scmp.eq.s32.totalorder %s14, 0
      %p50 = por %p48, %p49
      %p51 = scmp.ne.s32.totalorder %s43, %s45
      %p52 = scmp.eq.s32.totalorder %s19, 1
      %p53 = por %p51, %p52
      %p54 = scmp.ne.s32.totalorder %s45, %s46
      %p55 = scmp.eq.s32.totalorder %s19, 0
      %p56 = por %p54, %p55
      %p57 = scmp.ne.s32.totalorder %s45, %s46
      %p58 = scmp.eq.s32.totalorder %s20, 1
      %p59 = por %p57, %p58
      %p61 = scmp.ne.s32.totalorder %s46, %s60
      %p62 = scmp.eq.s32.totalorder %s20, 0
      %p63 = por %p61, %p62
      %s64 = ssub.s32 %s14, %s21
      %p65 = scmp.eq.s32.totalorder %s64, 0
      %s67 = sadd.s32 %s66, 1
      %s68 = scalar_select %p65, %s66, %s67
      %p71 = pneg %p65
      %p72 = scmp.eq.s32.totalorder %s14, 1
      %p73 = por %p71, %p72
      %p74 = scmp.ne.s32.totalorder %s66, %s69
      %p75 = scmp.eq.s32.totalorder %s14, 0
      %p76 = por %p74, %p75
      %p77 = scmp.ne.s32.totalorder %s66, %s69
      %p78 = scmp.eq.s32.totalorder %s19, 1
      %p79 = por %p77, %p78
      %p80 = scmp.ne.s32.totalorder %s69, %s70
      %p81 = scmp.eq.s32.totalorder %s19, 0
      %p82 = por %p80, %p81
      %p83 = scmp.ne.s32.totalorder %s69, %s70
      %p84 = scmp.eq.s32.totalorder %s20, 1
      %p85 = por %p83, %p84
      %p87 = scmp.ne.s32.totalorder %s70, %s86
      %p88 = scmp.eq.s32.totalorder %s20, 0
      %p89 = por %p87, %p88
      %s90 = ssub.s32 %s14, %s21
      %p91 = scmp.eq.s32.totalorder %s90, 0
      %s93 = sadd.s32 %s92, 1
      %s94 = scalar_select %p91, %s92, %s93
      %p97 = pneg %p91
      %p98 = scmp.eq.s32.totalorder %s14, 1
      %p99 = por %p97, %p98
      %p100 = scmp.ne.s32.totalorder %s92, %s95
      %p101 = scmp.eq.s32.totalorder %s14, 0
      %p102 = por %p100, %p101
      %p103 = scmp.ne.s32.totalorder %s92, %s95
      %p104 = scmp.eq.s32.totalorder %s19, 1
      %p105 = por %p103, %p104
      %p106 = scmp.ne.s32.totalorder %s95, %s96
      %p107 = scmp.eq.s32.totalorder %s19, 0
      %p108 = por %p106, %p107
      %p109 = scmp.ne.s32.totalorder %s95, %s96
      %p110 = scmp.eq.s32.totalorder %s20, 1
      %p111 = por %p109, %p110
      %p113 = scmp.ne.s32.totalorder %s96, %s112
      %p114 = scmp.eq.s32.totalorder %s20, 0
      %p115 = por %p113, %p114
      %p116 = scmp.le.s32.totalorder 1, %s14
      %p117 = scmp.lt.s32.totalorder %s14, 3
      %p118 = pnand %p116, %p117
      %p119 = pneg %p118
      // Predicated region
      $region9: #{tpu_custom_call.1} parent=5 // pred_check
        _
      $region10: #{tpu_custom_call.1} parent=5 // pred_check_branch
        %121 = sbr.rel (%p118) target = $region12
      $region11: #{tpu_custom_call.1} parent=5 // pred_region
        %s122 = ssub.s32 %s14, 1
        // Predicated region
        $region13: #{tpu_custom_call.1} parent=11 // pred_check
          %p123 = pneg %p35
        $region14: #{tpu_custom_call.1} parent=11 // pred_check_branch
          %125 = sbr.rel (%p123) target = $region16
        $region15: #{tpu_custom_call.1} parent=11 // pred_region
          %s127 = ssub.s32 256, 256
          %128 = vsyncadd [#allocation3], %s127
          %s129 = sshll.u32 [#allocation2], 4
          %s130 = int_to_ptr.vmem [resolvable:$true] %s129
          %135 = dma.hbm_to_vmem [thread:$0]  %s0, 256, %s130, [#allocation3], 128, 128, 8
        $region16: #{tpu_custom_call.1} parent=11 // pred_fallthru
          _
        // Predicated region
        $region17: #{tpu_custom_call.1} parent=11 // pred_check
          %p136 = pneg %p56
        $region18: #{tpu_custom_call.1} parent=11 // pred_check_branch
          %138 = sbr.rel (%p136) target = $region20
        $region19: #{tpu_custom_call.1} parent=11 // pred_region
          %s140 = ssub.s32 8192, 8192
          %141 = vsyncadd [#allocation6], %s140
          %s142 = sshll.u32 [#allocation5], 4
          %s143 = int_to_ptr.vmem [resolvable:$true] %s142
          %148 = dma.hbm_to_vmem [thread:$0]  %s1, 8192, %s143, [#allocation6], 256, 256, 16
        $region20: #{tpu_custom_call.1} parent=11 // pred_fallthru
          _
      $region12: #{tpu_custom_call.1} parent=5 // pred_fallthru
        _
      %p149 = scmp.lt.s32.totalorder %s14, 2
      // Predicated region
      $region21: #{tpu_custom_call.1} parent=5 // pred_check
        %p150 = pneg %p149
      $region22: #{tpu_custom_call.1} parent=5 // pred_check_branch
        %152 = sbr.rel (%p150) target = $region24
      $region23: #{tpu_custom_call.1} parent=5 // pred_region
        // Predicated region
        $region25: #{tpu_custom_call.1} parent=23 // pred_check
          %p153 = pneg %p76
        $region26: #{tpu_custom_call.1} parent=23 // pred_check_branch
          %155 = sbr.rel (%p153) target = $region28
        $region27: #{tpu_custom_call.1} parent=23 // pred_region
          %s156 = sand.u32 %s14, 1
          %s157 = scalar_lea.sflag [#allocation3], %s156
          %s158 = sand.u32 %s66, 1
          %s159 = smul.addr %s158, 32
          %s160 = scalar_lea.vmem [#allocation7], %s159
          %s162 = ssub.s32 512, 512
          %163 = vsyncadd %s157, %s162
          %s164 = smul.addr %s14, 4
          %s165 = smul.addr %s164, 128
          %s166 = scalar_lea.hbm %s2, %s165
          %s167 = sshll.u32 %s160, 4
          %s168 = int_to_ptr.vmem [resolvable:$true] %s167
          %173 = dma.hbm_to_vmem [thread:$0]  %s166, 512, %s168, %s157, 256, 256, 16
        $region28: #{tpu_custom_call.1} parent=23 // pred_fallthru
          _
      $region24: #{tpu_custom_call.1} parent=5 // pred_fallthru
        _
      %p174 = scmp.le.s32.totalorder 1, %s14
      %p175 = scmp.lt.s32.totalorder %s14, 3
      %p176 = pnand %p174, %p175
      %p177 = pneg %p176
      // Predicated region
      $region29: #{tpu_custom_call.1} parent=5 // pred_check
        _
      $region30: #{tpu_custom_call.1} parent=5 // pred_check_branch
        %179 = sbr.rel (%p176) target = $region32
      $region31: #{tpu_custom_call.1} parent=5 // pred_region
        %s180 = ssub.s32 %s14, 1
        // Predicated region
        $region33: #{tpu_custom_call.1} parent=31 // pred_check
          %p181 = pneg %p35
        $region34: #{tpu_custom_call.1} parent=31 // pred_check_branch
          %183 = sbr.rel (%p181) target = $region36
        $region35: #{tpu_custom_call.1} parent=31 // pred_region
          %184 = dma.done [#allocation3], 256
        $region36: #{tpu_custom_call.1} parent=31 // pred_fallthru
          _
        // Predicated region
        $region37: #{tpu_custom_call.1} parent=31 // pred_check
          %p185 = pneg %p56
        $region38: #{tpu_custom_call.1} parent=31 // pred_check_branch
          %187 = sbr.rel (%p185) target = $region40
        $region39: #{tpu_custom_call.1} parent=31 // pred_region
          %188 = dma.done [#allocation6], 8192
        $region40: #{tpu_custom_call.1} parent=31 // pred_fallthru
          _
        %s189 = sand.u32 %s19, 1
        %s190 = scalar_lea.sflag [#allocation3], %s189
        %s191 = sand.u32 %s69, 1
        %s192 = smul.addr %s191, 32
        %s193 = scalar_lea.vmem [#allocation7], %s192
        // Predicated region
        $region41: #{tpu_custom_call.1} parent=31 // pred_check
          %p194 = pneg %p82
        $region42: #{tpu_custom_call.1} parent=31 // pred_check_branch
          %196 = sbr.rel (%p194) target = $region44
        $region43: #{tpu_custom_call.1} parent=31 // pred_region
          %197 = dma.done %s190, 512
        $region44: #{tpu_custom_call.1} parent=31 // pred_fallthru
          _
        %p198 = pneg %p35
        %p199 = pneg %p32
        %p200 = pneg %p56
        %p201 = pneg %p53
        %s202 = sand.u32 %s19, 1
        %s203 = scalar_lea.sflag [#allocation3], %s202
        %s204 = sand.u32 %s69, 1
        %s205 = smul.addr %s204, 32
        %s206 = scalar_lea.vmem [#allocation7], %s205
        %p207 = pneg %p82
        %p208 = pneg %p79
        %p209 = pneg %p108
        %p210 = pneg %p105
        %s211 = sand.u32 %s95, 1
        %s212 = scalar_lea.sflag [#allocation4], %s211
        %s213 = sand.u32 %s95, 1
        %s214 = smul.addr %s213, 32
        %s215 = scalar_lea.vmem [#allocation8], %s214
        %v216 = vld [vmem:[%s193] sm:$0xff]
        %v217 = vld [vmem:[%s193 + $0x8] sm:$0xff]
        %v218 = vld [vmem:[%s193 + $0x10] sm:$0xff]
        %v219 = vld [vmem:[%s193 + $0x18] sm:$0xff]
        %v220 = vld [vmem:[#allocation2] sm:$0xff]
        %v221 = vld [vmem:[#allocation2 + $0x8] sm:$0xff]
        %vm222 = vcmask 130048
        %v224 = vsel %vm222, %v220, 0
        %v227 = vsel %vm222, %v221, 0
        %229 = vmatprep.subr.mxu0 %v217
        %230 = vmatpush1.msra.mxu0 %v216
        %231 = vmatprep.subr.mxu0 %v219
        %232 = vmatpush1.msra.mxu0 %v218
        %233 = vmatprep.subr.mxu0 0.0
        %234 = vmatpush1.msra.mxu0 0.0
        %235 = vmatprep.subr.mxu0 0.0
        %236 = vmatpush1.msra.mxu0 0.0
        %237 = vmatprep.subr.mxu0 0.0
        %238 = vmatpush1.msra.mxu0 0.0
        %239 = vmatprep.subr.mxu0 0.0
        %240 = vmatpush1.msra.mxu0 0.0
        %241 = vmatprep.subr.mxu0 0.0
        %242 = vmatpush1.msra.mxu0 0.0
        %243 = vmatprep.subr.mxu0 0.0
        %244 = vmatpush1.msra.mxu0 0.0
        %245 = vmatprep.subr.mxu0 0.0
        %246 = vmatpush1.msra.mxu0 0.0
        %247 = vmatprep.subr.mxu0 0.0
        %248 = vmatpush1.msra.mxu0 0.0
        %249 = vmatprep.subr.mxu0 0.0
        %250 = vmatpush1.msra.mxu0 0.0
        %251 = vmatprep.subr.mxu0 0.0
        %252 = vmatpush1.msra.mxu0 0.0
        %253 = vmatprep.subr.mxu0 0.0
        %254 = vmatpush1.msra.mxu0 0.0
        %255 = vmatprep.subr.mxu0 0.0
        %256 = vmatpush1.msra.mxu0 0.0
        %257 = vmatprep.subr.mxu0 0.0
        %258 = vmatpush1.msra.mxu0 0.0
        %259 = vmatprep.subr.mxu0 0.0
        %260 = vmatpush1.msra.mxu0 0.0
        %261 = vmatprep.subr.mxu0 0.0
        %262 = vmatpush1.msra.mxu0 0.0
        %263 = vmatprep.subr.mxu0 0.0
        %264 = vmatpush1.msra.mxu0 0.0
        %265 = vmatprep.subr.mxu0 0.0
        %266 = vmatpush1.msra.mxu0 0.0
        %267 = vmatprep.subr.mxu0 0.0
        %268 = vmatpush1.msra.mxu0 0.0
        %269 = vmatprep.subr.mxu0 0.0
        %270 = vmatpush1.msra.mxu0 0.0
        %271 = vmatprep.subr.mxu0 0.0
        %272 = vmatpush1.msra.mxu0 0.0
        %273 = vmatprep.subr.mxu0 0.0
        %274 = vmatpush1.msra.mxu0 0.0
        %275 = vmatprep.subr.mxu0 0.0
        %276 = vmatpush1.msra.mxu0 0.0
        %277 = vmatprep.subr.mxu0 0.0
        %278 = vmatpush1.msra.mxu0 0.0
        %279 = vmatprep.subr.mxu0 0.0
        %280 = vmatpush1.msra.mxu0 0.0
        %281 = vmatprep.subr.mxu0 0.0
        %282 = vmatpush1.msra.mxu0 0.0
        %283 = vmatprep.subr.mxu0 0.0
        %284 = vmatpush1.msra.mxu0 0.0
        %285 = vmatprep.subr.mxu0 0.0
        %286 = vmatpush1.msra.mxu0 0.0
        %287 = vmatprep.subr.mxu0 0.0
        %288 = vmatpush1.msra.mxu0 0.0
        %289 = vmatprep.subr.mxu0 0.0
        %290 = vmatpush1.msra.mxu0 0.0
        %291 = vmatprep.subr.mxu0 0.0
        %292 = vmatpush1.msra.mxu0 0.0
        %293 = vmatprep.mubr.f32.mxu0 0.0
        %294 = vmatmul.mubr.f32.gmra.mrb[0].mxu0 %v224
        %v295 = vpop.f32.mrb[0].mxu0
        %v296 = vadd.f32 0.0, %v295
        %v297 = vpop.f32.mrb[0].mxu0
        %v298 = vadd.f32 0.0, %v297
        %299 = vmatprep.mubr.f32.mxu0 0.0
        %300 = vmatmul.mubr.f32.gmra.mrb[0].mxu0 %v227
        %v301 = vpop.f32.mrb[0].mxu0
        %v302 = vadd.f32 0.0, %v301
        %v303 = vpop.f32.mrb[0].mxu0
        %v304 = vadd.f32 0.0, %v303
        %305 = vdwg.mxu0
        %v306 = vld [vmem:[#allocation5] sm:$0xff]
        %v307 = vld [vmem:[#allocation5 + $0x8] sm:$0xff]
        %v308 = vld [vmem:[#allocation5 + $0x10] sm:$0xff]
        %v309 = vld [vmem:[#allocation5 + $0x18] sm:$0xff]
        %v310 = vld [vmem:[#allocation5 + $0x20] sm:$0xff]
        %v311 = vld [vmem:[#allocation5 + $0x28] sm:$0xff]
        %v312 = vld [vmem:[#allocation5 + $0x30] sm:$0xff]
        %v313 = vld [vmem:[#allocation5 + $0x38] sm:$0xff]
        %v314 = vld [vmem:[#allocation5 + $0x40] sm:$0xff]
        %v315 = vld [vmem:[#allocation5 + $0x48] sm:$0xff]
        %v316 = vld [vmem:[#allocation5 + $0x50] sm:$0xff]
        %v317 = vld [vmem:[#allocation5 + $0x58] sm:$0xff]
        %v318 = vld [vmem:[#allocation5 + $0x60] sm:$0xff]
        %v319 = vld [vmem:[#allocation5 + $0x68] sm:$0xff]
        %v320 = vld [vmem:[#allocation5 + $0x70] sm:$0xff]
        %v321 = vld [vmem:[#allocation5 + $0x78] sm:$0xff]
        %v322 = vld [vmem:[#allocation5 + $0x80] sm:$0xff]
        %v323 = vld [vmem:[#allocation5 + $0x88] sm:$0xff]
        %v324 = vld [vmem:[#allocation5 + $0x90] sm:$0xff]
        %v325 = vld [vmem:[#allocation5 + $0x98] sm:$0xff]
        %v326 = vld [vmem:[#allocation5 + $0xa0] sm:$0xff]
        %v327 = vld [vmem:[#allocation5 + $0xa8] sm:$0xff]
        %v328 = vld [vmem:[#allocation5 + $0xb0] sm:$0xff]
        %v329 = vld [vmem:[#allocation5 + $0xb8] sm:$0xff]
        %v330 = vld [vmem:[#allocation5 + $0xc0] sm:$0xff]
        %v331 = vld [vmem:[#allocation5 + $0xc8] sm:$0xff]
        %v332 = vld [vmem:[#allocation5 + $0xd0] sm:$0xff]
        %v333 = vld [vmem:[#allocation5 + $0xd8] sm:$0xff]
        %v334 = vld [vmem:[#allocation5 + $0xe0] sm:$0xff]
        %v335 = vld [vmem:[#allocation5 + $0xe8] sm:$0xff]
        %v336 = vld [vmem:[#allocation5 + $0xf0] sm:$0xff]
        %v337 = vld [vmem:[#allocation5 + $0xf8] sm:$0xff]
        %v338 = vld [vmem:[#allocation5 + $0x100] sm:$0xff]
        %v339 = vld [vmem:[#allocation5 + $0x108] sm:$0xff]
        %v340 = vld [vmem:[#allocation5 + $0x110] sm:$0xff]
        %v341 = vld [vmem:[#allocation5 + $0x118] sm:$0xff]
        %v342 = vld [vmem:[#allocation5 + $0x120] sm:$0xff]
        %v343 = vld [vmem:[#allocation5 + $0x128] sm:$0xff]
        %v344 = vld [vmem:[#allocation5 + $0x130] sm:$0xff]
        %v345 = vld [vmem:[#allocation5 + $0x138] sm:$0xff]
        %v346 = vld [vmem:[#allocation5 + $0x140] sm:$0xff]
        %v347 = vld [vmem:[#allocation5 + $0x148] sm:$0xff]
        %v348 = vld [vmem:[#allocation5 + $0x150] sm:$0xff]
        %v349 = vld [vmem:[#allocation5 + $0x158] sm:$0xff]
        %v350 = vld [vmem:[#allocation5 + $0x160] sm:$0xff]
        %v351 = vld [vmem:[#allocation5 + $0x168] sm:$0xff]
        %v352 = vld [vmem:[#allocation5 + $0x170] sm:$0xff]
        %v353 = vld [vmem:[#allocation5 + $0x178] sm:$0xff]
        %v354 = vld [vmem:[#allocation5 + $0x180] sm:$0xff]
        %v355 = vld [vmem:[#allocation5 + $0x188] sm:$0xff]
        %v356 = vld [vmem:[#allocation5 + $0x190] sm:$0xff]
        %v357 = vld [vmem:[#allocation5 + $0x198] sm:$0xff]
        %v358 = vld [vmem:[#allocation5 + $0x1a0] sm:$0xff]
        %v359 = vld [vmem:[#allocation5 + $0x1a8] sm:$0xff]
        %v360 = vld [vmem:[#allocation5 + $0x1b0] sm:$0xff]
        %v361 = vld [vmem:[#allocation5 + $0x1b8] sm:$0xff]
        %v362 = vld [vmem:[#allocation5 + $0x1c0] sm:$0xff]
        %v363 = vld [vmem:[#allocation5 + $0x1c8] sm:$0xff]
        %v364 = vld [vmem:[#allocation5 + $0x1d0] sm:$0xff]
        %v365 = vld [vmem:[#allocation5 + $0x1d8] sm:$0xff]
        %v366 = vld [vmem:[#allocation5 + $0x1e0] sm:$0xff]
        %v367 = vld [vmem:[#allocation5 + $0x1e8] sm:$0xff]
        %v368 = vld [vmem:[#allocation5 + $0x1f0] sm:$0xff]
        %v369 = vld [vmem:[#allocation5 + $0x1f8] sm:$0xff]
        %370 = vmatprep.subr.mxu0 %v307
        %371 = vmatpush1.msra.mxu0 %v306
        %372 = vmatprep.subr.mxu0 %v309
        %373 = vmatpush1.msra.mxu0 %v308
        %374 = vmatprep.subr.mxu0 %v311
        %375 = vmatpush1.msra.mxu0 %v310
        %376 = vmatprep.subr.mxu0 %v313
        %377 = vmatpush1.msra.mxu0 %v312
        %378 = vmatprep.subr.mxu0 %v315
        %379 = vmatpush1.msra.mxu0 %v314
        %380 = vmatprep.subr.mxu0 %v317
        %381 = vmatpush1.msra.mxu0 %v316
        %382 = vmatprep.subr.mxu0 %v319
        %383 = vmatpush1.msra.mxu0 %v318
        %384 = vmatprep.subr.mxu0 %v321
        %385 = vmatpush1.msra.mxu0 %v320
        %386 = vmatprep.subr.mxu0 %v323
        %387 = vmatpush1.msra.mxu0 %v322
        %388 = vmatprep.subr.mxu0 %v325
        %389 = vmatpush1.msra.mxu0 %v324
        %390 = vmatprep.subr.mxu0 %v327
        %391 = vmatpush1.msra.mxu0 %v326
        %392 = vmatprep.subr.mxu0 %v329
        %393 = vmatpush1.msra.mxu0 %v328
        %394 = vmatprep.subr.mxu0 %v331
        %395 = vmatpush1.msra.mxu0 %v330
        %396 = vmatprep.subr.mxu0 %v333
        %397 = vmatpush1.msra.mxu0 %v332
        %398 = vmatprep.subr.mxu0 %v335
        %399 = vmatpush1.msra.mxu0 %v334
        %400 = vmatprep.subr.mxu0 %v337
        %401 = vmatpush1.msra.mxu0 %v336
        %402 = vmatprep.subr.mxu0 %v339
        %403 = vmatpush1.msra.mxu0 %v338
        %404 = vmatprep.subr.mxu0 %v341
        %405 = vmatpush1.msra.mxu0 %v340
        %406 = vmatprep.subr.mxu0 %v343
        %407 = vmatpush1.msra.mxu0 %v342
        %408 = vmatprep.subr.mxu0 %v345
        %409 = vmatpush1.msra.mxu0 %v344
        %410 = vmatprep.subr.mxu0 %v347
        %411 = vmatpush1.msra.mxu0 %v346
        %412 = vmatprep.subr.mxu0 %v349
        %413 = vmatpush1.msra.mxu0 %v348
        %414 = vmatprep.subr.mxu0 %v351
        %415 = vmatpush1.msra.mxu0 %v350
        %416 = vmatprep.subr.mxu0 %v353
        %417 = vmatpush1.msra.mxu0 %v352
        %418 = vmatprep.subr.mxu0 %v355
        %419 = vmatpush1.msra.mxu0 %v354
        %420 = vmatprep.subr.mxu0 %v357
        %421 = vmatpush1.msra.mxu0 %v356
        %422 = vmatprep.subr.mxu0 %v359
        %423 = vmatpush1.msra.mxu0 %v358
        %424 = vmatprep.subr.mxu0 %v361
        %425 = vmatpush1.msra.mxu0 %v360
        %426 = vmatprep.subr.mxu0 %v363
        %427 = vmatpush1.msra.mxu0 %v362
        %428 = vmatprep.subr.mxu0 %v365
        %429 = vmatpush1.msra.mxu0 %v364
        %430 = vmatprep.subr.mxu0 %v367
        %431 = vmatpush1.msra.mxu0 %v366
        %432 = vmatprep.subr.mxu0 %v369
        %433 = vmatpush1.msra.mxu0 %v368
        %434 = vmatprep.mubr.f32.mxu0 %v298
        %435 = vmatmul.mubr.f32.gmra.mrb[0].mxu0 %v296
        %v436 = vpop.f32.mrb[0].mxu0
        %v437 = vadd.f32 0.0, %v436
        %v438 = vpop.f32.mrb[0].mxu0
        %v439 = vadd.f32 0.0, %v438
        %440 = vmatprep.mubr.f32.mxu0 %v304
        %441 = vmatmul.mubr.f32.gmra.mrb[0].mxu0 %v302
        %v442 = vpop.f32.mrb[0].mxu0
        %v443 = vadd.f32 0.0, %v442
        %v444 = vpop.f32.mrb[0].mxu0
        %v445 = vadd.f32 0.0, %v444
        %446 = vdwg.mxu0
        %v447 = vmax.f32 %v437, 0.0
        %v448 = vmax.f32 %v439, 0.0
        %v449 = vmax.f32 %v443, 0.0
        %v450 = vmax.f32 %v445, 0.0
        %451 = vst [vmem:[%s215] sm:$0xff] %v447
        %452 = vst [vmem:[%s215 + $0x8] sm:$0xff] %v448
        %453 = vst [vmem:[%s215 + $0x10] sm:$0xff] %v449
        %454 = vst [vmem:[%s215 + $0x18] sm:$0xff] %v450
        %s455 = sand.u32 %s95, 1
        %s456 = scalar_lea.sflag [#allocation4], %s455
        %s457 = sand.u32 %s95, 1
        %s458 = smul.addr %s457, 32
        %s459 = scalar_lea.vmem [#allocation8], %s458
        // Predicated region
        $region45: #{tpu_custom_call.1} parent=31 // pred_check
          %p460 = pneg %p105
        $region46: #{tpu_custom_call.1} parent=31 // pred_check_branch
          %462 = sbr.rel (%p460) target = $region48
        $region47: #{tpu_custom_call.1} parent=31 // pred_region
          %s464 = ssub.s32 512, 512
          %465 = vsyncadd %s456, %s464
          %s466 = smul.addr %s19, 4
          %s467 = smul.addr %s466, 128
          %s468 = scalar_lea.hbm %s3, %s467
          %s469 = sshll.u32 %s459, 4
          %s470 = int_to_ptr.vmem [resolvable:$true] %s469
          %475 = dma.vmem_to_hbm [thread:$0]  %s470, 512, %s468, %s456, 256, 256, 16
        $region48: #{tpu_custom_call.1} parent=31 // pred_fallthru
          _
      $region32: #{tpu_custom_call.1} parent=5 // pred_fallthru
        _
      %p476 = scmp.le.s32.totalorder 2, %s14
      // Predicated region
      $region49: #{tpu_custom_call.1} parent=5 // pred_check
        %p477 = pneg %p476
      $region50: #{tpu_custom_call.1} parent=5 // pred_check_branch
        %479 = sbr.rel (%p477) target = $region52
      $region51: #{tpu_custom_call.1} parent=5 // pred_region
        %s480 = ssub.s32 %s14, 2
        // Predicated region
        $region53: #{tpu_custom_call.1} parent=51 // pred_check
          %p481 = pneg %p111
        $region54: #{tpu_custom_call.1} parent=51 // pred_check_branch
          %483 = sbr.rel (%p481) target = $region56
        $region55: #{tpu_custom_call.1} parent=51 // pred_region
          %s484 = sand.u32 %s96, 1
          %s485 = scalar_lea.sflag [#allocation4], %s484
          %s486 = sand.u32 %s96, 1
          %s487 = smul.addr %s486, 32
          %s488 = scalar_lea.vmem [#allocation8], %s487
          %489 = dma.done %s485, 512
        $region56: #{tpu_custom_call.1} parent=51 // pred_fallthru
          _
      $region52: #{tpu_custom_call.1} parent=5 // pred_fallthru
        _
    $region6: #{tpu_custom_call.1} parent=1 // loop_footer
      %s18 = sadd.s32 1, %s14
    $region7: #{tpu_custom_call.1} parent=1 // loop_footer_branch
      %13 = sbr.rel target = $region3
    $region8: #{tpu_custom_call.1} parent=1 // loop_exit
      _
    %490 = vsyncpa [#allocation3], 1
    %s491 = scalar_lea.sflag [#allocation3], 1
    %492 = vsyncpa %s491, 1
    %493 = vsyncpa [#allocation6], 1
    %494 = vsyncpa [#allocation4], 1
    %s495 = scalar_lea.sflag [#allocation4], 1
    %496 = vsyncpa %s495, 1

</llo_original>
